<compile_context>
chip_gen: v5e
topology: v5e:2x2
jax: 0.10.0
libtpu: 0.0.40
codegen_flags: <defaults>
</compile_context>

<pallas_src>
import jax
import jax.numpy as jnp
from jax.experimental import pallas as pl
from jax.experimental.pallas import tpu as pltpu


def _projector_kernel(x_ref, w1_ref, b1_ref, w2_ref, b2_ref, o_ref):
    # Stage 1: Linear(input_dim -> hidden) + ReLU.  Cast to f32 in-kernel
    # (mirrors torch's x.float()); MXU accumulates in f32.
    x = x_ref[...].astype(jnp.float32)
    h = jnp.dot(x, w1_ref[...], preferred_element_type=jnp.float32)
    h = jnp.maximum(h + b1_ref[...], 0.0)

    # Stage 2: Linear(hidden -> output_dim) + ReLU.
    y = jnp.dot(h, w2_ref[...], preferred_element_type=jnp.float32)
    o_ref[...] = jnp.maximum(y + b2_ref[...], 0.0).astype(o_ref.dtype)


def _round_up(n, m):
    return ((n + m - 1) // m) * m


def _block_diag(w, p):
    """Block-diagonal replication of a (tiny) weight matrix (wrapper-side)."""
    if p == 1:
        return w
    k, n = w.shape
    out = jnp.zeros((p * k, p * n), w.dtype)
    for i in range(p):
        out = out.at[i * k:(i + 1) * k, i * n:(i + 1) * n].set(w)
    return out


def _tpu_config():
    """Returns (generation, tensorcores_per_chip, buffer_budget_bytes, vmem_limit_bytes)."""
    kind = ""
    try:
        dev = jax.devices()[0]
        if dev.platform == "tpu":
            kind = dev.device_kind.lower()
    except Exception:
        pass
    if "v6" in kind:                                   # v6e: 128 MiB VMEM, 1 TC
        return "v6e", 1, 32 << 20, 64 << 20
    if "v7" in kind or "7x" in kind or kind.startswith("tpu7"):
        return "v7x", 2, 32 << 20, 48 << 20            # 64 MiB VMEM per TC, 2 TCs
    if "v5" in kind and ("lite" in kind or "v5e" in kind):
        return "v5e", 1, 16 << 20, 48 << 20            # raise 16 MiB default scoped limit
    return "other", 1, 16 << 20, 48 << 20              # conservative fallback


def tabular_feature_projector(x, w1, b1, w2, b2, *, out_dtype=jnp.float32, tb_max=None):
    """Fused MLP projector.

    x  : (B, input_dim)    any float/int dtype (cast to f32 in-kernel, matching x.float())
    w1 : (input_dim, 32)   f32 (transposed vs. torch's (32, input_dim))
    b1 : (1, 32)           f32
    w2 : (32, output_dim)  f32
    b2 : (1, output_dim)   f32
    returns (B, output_dim) out_dtype (default f32)
    tb_max: optional cap on un-packed batch rows per grid step (testing knob).
    """
    B, input_dim = x.shape
    hidden = w1.shape[1]
    output_dim = w2.shape[1]

    # --- lane-dense output packing factor --------------------------------
    # Fold P consecutive batch rows into one 128-wide lane row when possible
    # (unmasked vst + dense writeback DMA for output_dim < 128).
    if output_dim < 128 and 128 % output_dim == 0:
        P = 128 // output_dim
    else:
        P = 1

    w1p = _block_diag(w1.astype(jnp.float32), P)               # (P*in,  P*hidden)
    w2p = _block_diag(w2.astype(jnp.float32), P)               # (P*hid, P*out)
    b1p = jnp.tile(b1.astype(jnp.float32).reshape(1, hidden), (1, P))      # (1, P*hidden)
    b2p = jnp.tile(b2.astype(jnp.float32).reshape(1, output_dim), (1, P))  # (1, P*out)

    # --- batch packing (pad only to a multiple of P, never to a tile) ----
    Bp = _round_up(B, P)
    if Bp != B:
        x = jnp.pad(x, ((0, Bp - B), (0, 0)))                  # <= P-1 rows
    packed_rows = Bp // P
    xp = x.reshape(packed_rows, P * input_dim)                 # row-major, free

    # --- generation-aware tile selection ----------------------------------
    x_item = jnp.dtype(x.dtype).itemsize
    o_item = jnp.dtype(out_dtype).itemsize
    row_mult = max(8, 32 // x_item, 32 // o_item)              # dtype-aware sublane multiple

    gen, n_cores, buf_budget, vmem_limit = _tpu_config()

    lanes_x = _round_up(P * input_dim, 128)                    # VMEM lane padding
    lanes_o = _round_up(P * output_dim, 128)
    per_row_vmem = 2 * (lanes_x * x_item + lanes_o * o_item)   # double-buffered bytes/row

    tbp = max(row_mult, (buf_budget // per_row_vmem) // row_mult * row_mult)
    if tb_max is not None:
        tbp = min(tbp, max(row_mult, _round_up(max(1, tb_max // P), row_mult)))
    tbp = min(tbp, _round_up(packed_rows, row_mult))
    if n_cores > 1 and packed_rows >= 4 * row_mult:
        # Keep both v7x TensorCores fed: aim for >= 2 grid steps per core.
        tbp = min(tbp, _round_up(pl.cdiv(packed_rows, 2 * n_cores), row_mult))

    grid = (pl.cdiv(packed_rows, tbp),)                        # ragged last block OK

    cost = pl.CostEstimate(
        flops=2 * Bp * (input_dim * hidden + hidden * output_dim),
        transcendentals=0,
        bytes_accessed=(Bp * input_dim * x_item + Bp * output_dim * o_item
                        + 4 * (input_dim * hidden + hidden * output_dim
                               + hidden + output_dim)),
    )

    out_packed = pl.pallas_call(
        _projector_kernel,
        out_shape=jax.ShapeDtypeStruct((packed_rows, P * output_dim), out_dtype),
        grid=grid,
        in_specs=[
            pl.BlockSpec((tbp, P * input_dim), lambda i: (i, 0)),   # x tile (pipelined)
            pl.BlockSpec(w1p.shape, lambda i: (0, 0)),              # weights: constant
            pl.BlockSpec(b1p.shape, lambda i: (0, 0)),              # block index ->
            pl.BlockSpec(w2p.shape, lambda i: (0, 0)),              # no re-DMA per step
            pl.BlockSpec(b2p.shape, lambda i: (0, 0)),
        ],
        out_specs=pl.BlockSpec((tbp, P * output_dim), lambda i: (i, 0)),
        compiler_params=pltpu.CompilerParams(
            dimension_semantics=("parallel",),
            vmem_limit_bytes=vmem_limit,
        ),
        cost_estimate=cost,
    )(xp, w1p, b1p, w2p, b2p)

    out = out_packed.reshape(Bp, output_dim)
    return out[:B] if Bp != B else out


def init_params(key, input_dim, output_dim=64, hidden=32):
    """Deterministic parameter init (uniform, roughly matching torch defaults)."""
    k1, k2, k3, k4 = jax.random.split(key, 4)
    bound1 = 1.0 / jnp.sqrt(input_dim)
    bound2 = 1.0 / jnp.sqrt(hidden)
    w1 = jax.random.uniform(k1, (input_dim, hidden), jnp.float32, -bound1, bound1)
    b1 = jax.random.uniform(k2, (1, hidden), jnp.float32, -bound1, bound1)
    w2 = jax.random.uniform(k3, (hidden, output_dim), jnp.float32, -bound2, bound2)
    b2 = jax.random.uniform(k4, (1, output_dim), jnp.float32, -bound2, bound2)
    return w1, b1, w2, b2


def _reference(x, w1, b1, w2, b2):
    h = jnp.maximum(x.astype(jnp.float32) @ w1 + b1, 0.0)
    return jnp.maximum(h @ w2 + b2, 0.0)


if __name__ == "__main__":
    key = jax.random.PRNGKey(0)
    kx, kp, kx2, kx3 = jax.random.split(key, 4)

    input_dim, output_dim = 10, 64
    w1, b1, w2, b2 = init_params(kp, input_dim, output_dim)

    # Small case (matches the module's intended use): 4 tabular feature rows.
    x = jax.random.normal(kx, (4, input_dim), jnp.float32)
    out = jax.block_until_ready(tabular_feature_projector(x, w1, b1, w2, b2))
    ref = _reference(x, w1, b1, w2, b2)
    assert out.shape == (4, output_dim) and out.dtype == jnp.float32
    assert jnp.allclose(out, ref, atol=1e-5, rtol=1e-5)

    # Ragged, multi-tile case: odd batch exercises pad-to-P, the cdiv grid with
    # a partial last block (OOB writes dropped), and the tiny final [:B] slice.
    x2 = jax.random.normal(kx2, (1001, input_dim), jnp.float32)
    out2 = jax.block_until_ready(
        tabular_feature_projector(x2, w1, b1, w2, b2, tb_max=256))
    ref2 = _reference(x2, w1, b1, w2, b2)
    assert out2.shape == (1001, output_dim)
    assert jnp.allclose(out2, ref2, atol=1e-5, rtol=1e-5)

    # bf16 input: the f32 cast happens in-kernel (no wrapper HBM round trip),
    # dtype-aware 16-row sublane multiple on the x tile.
    x3 = jax.random.normal(kx3, (16, input_dim), jnp.float32).astype(jnp.bfloat16)
    out3 = jax.block_until_ready(tabular_feature_projector(x3, w1, b1, w2, b2))
    ref3 = _reference(x3, w1, b1, w2, b2)
    assert out3.shape == (16, output_dim) and out3.dtype == jnp.float32
    assert jnp.allclose(out3, ref3, atol=1e-4, rtol=1e-4)

    print("KERNEL_OK")
</pallas_src>

<mosaic_0001>
module attributes {stable_mosaic.version = 11 : i64} {
  func.func @_projector_kernel(%arg0: i32, %arg1: memref<8x20xf32, #tpu.memory_space<vmem>>, %arg2: memref<20x64xf32, #tpu.memory_space<vmem>>, %arg3: memref<1x64xf32, #tpu.memory_space<vmem>>, %arg4: memref<64x128xf32, #tpu.memory_space<vmem>>, %arg5: memref<1x128xf32, #tpu.memory_space<vmem>>, %arg6: memref<8x128xf32, #tpu.memory_space<vmem>>) attributes {dimension_semantics = [#tpu.dimension_semantics<parallel>], iteration_bounds = array<i64: 1>, scalar_prefetch = 0 : i64, scratch_operands = 0 : i64, tpu.core_type = #tpu.core_type<tc>, window_params = [{transform_indices = @transform_0, window_bounds = array<i64: 8, 20>}, {pipeline_mode = #tpu.pipeline_mode<synchronous>, transform_indices = @transform_1, window_bounds = array<i64: 20, 64>}, {pipeline_mode = #tpu.pipeline_mode<synchronous>, transform_indices = @transform_2, window_bounds = array<i64: 1, 64>}, {pipeline_mode = #tpu.pipeline_mode<synchronous>, transform_indices = @transform_3, window_bounds = array<i64: 64, 128>}, {pipeline_mode = #tpu.pipeline_mode<synchronous>, transform_indices = @transform_4, window_bounds = array<i64: 1, 128>}, {transform_indices = @transform_5, window_bounds = array<i64: 8, 128>}]} {
    %c0 = arith.constant 0 : index
    %c0_0 = arith.constant 0 : index
    %0 = vector.load %arg1[%c0, %c0_0] : memref<8x20xf32, #tpu.memory_space<vmem>>, vector<8x20xf32>
    %c0_1 = arith.constant 0 : index
    %c0_2 = arith.constant 0 : index
    %1 = vector.load %arg2[%c0_1, %c0_2] : memref<20x64xf32, #tpu.memory_space<vmem>>, vector<20x64xf32>
    %cst = arith.constant dense<0.000000e+00> : vector<8x64xf32>
    %2 = tpu.matmul %0, %1, %cst {dimension_numbers = #tpu.dot_dimension_numbers<[1], [0], [0], [1], [0, 0, 1, 1], [], []>} : vector<8x20xf32>, vector<20x64xf32>, vector<8x64xf32> -> vector<8x64xf32>
    %c0_3 = arith.constant 0 : index
    %c0_4 = arith.constant 0 : index
    %3 = vector.load %arg3[%c0_3, %c0_4] : memref<1x64xf32, #tpu.memory_space<vmem>>, vector<1x64xf32>
    %4 = vector.broadcast %3 : vector<1x64xf32> to vector<8x64xf32>
    %5 = arith.addf %2, %4 : vector<8x64xf32>
    %cst_5 = arith.constant 0.000000e+00 : f32
    %6 = vector.broadcast %cst_5 : f32 to vector<8x64xf32>
    %7 = arith.maximumf %5, %6 : vector<8x64xf32>
    %c0_6 = arith.constant 0 : index
    %c0_7 = arith.constant 0 : index
    %8 = vector.load %arg4[%c0_6, %c0_7] : memref<64x128xf32, #tpu.memory_space<vmem>>, vector<64x128xf32>
    %cst_8 = arith.constant dense<0.000000e+00> : vector<8x128xf32>
    %9 = tpu.matmul %7, %8, %cst_8 {dimension_numbers = #tpu.dot_dimension_numbers<[1], [0], [0], [1], [0, 0, 1, 1], [], []>} : vector<8x64xf32>, vector<64x128xf32>, vector<8x128xf32> -> vector<8x128xf32>
    %c0_9 = arith.constant 0 : index
    %c0_10 = arith.constant 0 : index
    %10 = vector.load %arg5[%c0_9, %c0_10] : memref<1x128xf32, #tpu.memory_space<vmem>>, vector<1x128xf32>
    %11 = vector.broadcast %10 : vector<1x128xf32> to vector<8x128xf32>
    %12 = arith.addf %9, %11 : vector<8x128xf32>
    %cst_11 = arith.constant 0.000000e+00 : f32
    %13 = vector.broadcast %cst_11 : f32 to vector<8x128xf32>
    %14 = arith.maximumf %12, %13 : vector<8x128xf32>
    %c0_12 = arith.constant 0 : index
    %c0_13 = arith.constant 0 : index
    %15 = vector.load %arg6[%c0_12, %c0_13] : memref<8x128xf32, #tpu.memory_space<vmem>>, vector<8x128xf32>
    tpu.vector_store %arg6[%c0_12, %c0_13], %14 {strides = array<i32>} : memref<8x128xf32, #tpu.memory_space<vmem>>, vector<8x128xf32>,
    return
  }
  func.func @transform_0(%arg0: i32) -> (i32, i32) {
    %c0_i32 = arith.constant 0 : i32
    %c0_i32_0 = arith.constant 0 : i32
    return %arg0, %c0_i32 : i32, i32
  }
  func.func @transform_1(%arg0: i32) -> (i32, i32) {
    %c0_i32 = arith.constant 0 : i32
    %c0_i32_0 = arith.constant 0 : i32
    %c0_i32_1 = arith.constant 0 : i32
    return %c0_i32, %c0_i32_0 : i32, i32
  }
  func.func @transform_2(%arg0: i32) -> (i32, i32) {
    %c0_i32 = arith.constant 0 : i32
    %c0_i32_0 = arith.constant 0 : i32
    %c0_i32_1 = arith.constant 0 : i32
    return %c0_i32, %c0_i32_0 : i32, i32
  }
  func.func @transform_3(%arg0: i32) -> (i32, i32) {
    %c0_i32 = arith.constant 0 : i32
    %c0_i32_0 = arith.constant 0 : i32
    %c0_i32_1 = arith.constant 0 : i32
    return %c0_i32, %c0_i32_0 : i32, i32
  }
  func.func @transform_4(%arg0: i32) -> (i32, i32) {
    %c0_i32 = arith.constant 0 : i32
    %c0_i32_0 = arith.constant 0 : i32
    %c0_i32_1 = arith.constant 0 : i32
    return %c0_i32, %c0_i32_0 : i32, i32
  }
  func.func @transform_5(%arg0: i32) -> (i32, i32) {
    %c0_i32 = arith.constant 0 : i32
    %c0_i32_0 = arith.constant 0 : i32
    return %arg0, %c0_i32 : i32, i32
  }
}

</mosaic_0001>

<llo_original>
// kernel: tpu_custom_call.1
$region0: #{tpu_custom_call.1}
  #allocation0 [shape = 'u32[]', space=smem, size = 0x4, offset = 0x4, fixed_abs, tag = 'smem constant byte address 0x4 - core index']
  #allocation1 [shape = 'u32[72,128]{1,0:T(1,128)}', space=vmem, size = 0x9000, scoped, tag = 'internal scratch']
  %s0 = inlined_call_operand.hbm [shape: f32[2,20], index: 0, kind: input, shape index: {}]
  %s1 = inlined_call_operand.hbm [shape: f32[20,64], index: 1, kind: input, shape index: {}]
  %s2 = inlined_call_operand.vmem [shape: f32[1,64], index: 2, kind: input, shape index: {}]
  %s3 = inlined_call_operand.hbm [shape: f32[64,128], index: 3, kind: input, shape index: {}]
  %s4 = inlined_call_operand.vmem [shape: f32[1,128], index: 4, kind: input, shape index: {}]
  %s5 = inlined_call_operand.hbm [shape: f32[2,128], index: 5, kind: output, shape index: {}]
  %s6 = sld [smem:[#allocation0]]
  $region42: #{tpu_custom_call.1} parent=0
    _
  %s8 = ssub.s32 1, %s6
  %s9 = scalar_select 0, %s8, %s6
  $region1: #{tpu_custom_call.1} parent=0
    #allocation2 [shape = 'u8[4096]{0}', space=vmem, size = 0x1000, scoped, tag = 'input window, operand 0, single buffered']
    #allocation3 [shape = 's32[1]{0}', space=sflag, size = 0x4, scoped, tag = 'scoped memory for tpu_custom_call.1']
    #allocation4 [shape = 's32[1]{0}', space=sflag, size = 0x4, scoped, tag = 'scoped memory for tpu_custom_call.1']
    #allocation5 [shape = 'u8[12288]{0}', space=vmem, size = 0x3000, scoped, tag = 'input window, operand 1, single buffered']
    #allocation6 [shape = 's32[1]{0}', space=sflag, size = 0x4, scoped, tag = 'scoped memory for tpu_custom_call.1']
    #allocation7 [shape = 'u8[32768]{0}', space=vmem, size = 0x8000, scoped, tag = 'input window, operand 3, single buffered']
    #allocation8 [shape = 'u8[4096]{0}', space=vmem, size = 0x1000, scoped, tag = 'output window, operand 0, single buffered']
    %10 = vsyncpa [#allocation3], 0
    %11 = vsyncpa [#allocation6], 0
    %12 = vsyncpa [#allocation4], 0
    // Predicated region
    $region2: #{tpu_custom_call.1} parent=1 // pred_check
      _
    $region3: #{tpu_custom_call.1} parent=1 // pred_check_branch
      %14 = sbr.rel (0) target = $region5
    $region4: #{tpu_custom_call.1} parent=1 // pred_region
      %16 = vsyncadd [#allocation3], 96
      %s17 = sshll.u32 %s0, 4
      %s18 = int_to_ptr.hbm [resolvable:$true] %s17
      %s19 = sshll.u32 [#allocation2], 4
      %s20 = int_to_ptr.vmem [resolvable:$true] %s19
      %25 = dma.hbm_to_vmem [thread:$0]  %s18, 32, %s20, [#allocation3], 32, 32, 2
    $region5: #{tpu_custom_call.1} parent=1 // pred_fallthru
      _
    // Predicated region
    $region6: #{tpu_custom_call.1} parent=1 // pred_check
      _
    $region7: #{tpu_custom_call.1} parent=1 // pred_check_branch
      %27 = sbr.rel (0) target = $region9
    $region8: #{tpu_custom_call.1} parent=1 // pred_region
      %29 = vsyncadd [#allocation6], 0
      %s30 = sshll.u32 %s1, 4
      %s31 = int_to_ptr.hbm [resolvable:$true] %s30
      %s32 = sshll.u32 [#allocation5], 4
      %s33 = int_to_ptr.vmem [resolvable:$true] %s32
      %38 = dma.hbm_to_vmem [thread:$0]  %s31, 384, %s33, [#allocation6], 128, 128, 8
    $region9: #{tpu_custom_call.1} parent=1 // pred_fallthru
      _
    // Predicated region
    $region10: #{tpu_custom_call.1} parent=1 // pred_check
      _
    $region11: #{tpu_custom_call.1} parent=1 // pred_check_branch
      %40 = sbr.rel (0) target = $region13
    $region12: #{tpu_custom_call.1} parent=1 // pred_region
      _
    $region13: #{tpu_custom_call.1} parent=1 // pred_fallthru
      _
    // Predicated region
    $region14: #{tpu_custom_call.1} parent=1 // pred_check
      _
    $region15: #{tpu_custom_call.1} parent=1 // pred_check_branch
      %42 = sbr.rel (0) target = $region17
    $region16: #{tpu_custom_call.1} parent=1 // pred_region
      %44 = vsyncadd [#allocation6], 0
      %s45 = sshll.u32 %s3, 4
      %s46 = int_to_ptr.hbm [resolvable:$true] %s45
      %s47 = sshll.u32 [#allocation7], 4
      %s48 = int_to_ptr.vmem [resolvable:$true] %s47
      %53 = dma.hbm_to_vmem [thread:$0]  %s46, 1024, %s48, [#allocation6], 128, 128, 8
    $region17: #{tpu_custom_call.1} parent=1 // pred_fallthru
      _
    // Predicated region
    $region18: #{tpu_custom_call.1} parent=1 // pred_check
      _
    $region19: #{tpu_custom_call.1} parent=1 // pred_check_branch
      %55 = sbr.rel (0) target = $region21
    $region20: #{tpu_custom_call.1} parent=1 // pred_region
      _
    $region21: #{tpu_custom_call.1} parent=1 // pred_fallthru
      _
    // Predicated region
    $region22: #{tpu_custom_call.1} parent=1 // pred_check
      _
    $region23: #{tpu_custom_call.1} parent=1 // pred_check_branch
      %57 = sbr.rel (0) target = $region25
    $region24: #{tpu_custom_call.1} parent=1 // pred_region
      %59 = dma.done [#allocation3], 128
    $region25: #{tpu_custom_call.1} parent=1 // pred_fallthru
      _
    // Predicated region
    $region26: #{tpu_custom_call.1} parent=1 // pred_check
      _
    $region27: #{tpu_custom_call.1} parent=1 // pred_check_branch
      %61 = sbr.rel (0) target = $region29
    $region28: #{tpu_custom_call.1} parent=1 // pred_region
      %63 = dma.done [#allocation6], 384
    $region29: #{tpu_custom_call.1} parent=1 // pred_fallthru
      _
    // Predicated region
    $region30: #{tpu_custom_call.1} parent=1 // pred_check
      _
    $region31: #{tpu_custom_call.1} parent=1 // pred_check_branch
      %65 = sbr.rel (0) target = $region33
    $region32: #{tpu_custom_call.1} parent=1 // pred_region
      %67 = dma.done [#allocation6], 1024
    $region33: #{tpu_custom_call.1} parent=1 // pred_fallthru
      _
    %v68 = vld [vmem:[#allocation2] sm:$0xff]
    %v69 = vld [vmem:[#allocation5] sm:$0xff]
    %v70 = vld [vmem:[#allocation5 + $0x8] sm:$0xff]
    %v71 = vld [vmem:[#allocation5 + $0x10] sm:$0xf]
    %v72 = vld [vmem:[%s2] sm:$0x1]
    %v74 = vperm.slane %v72, 0
    %vm76 = vcmask 162816
    %v78 = vsel %vm76, %v68, 0
    %vm80 = vcmask 1043456
    %v82 = vsel %vm80, %v71, 0
    %84 = vmatpush.msra.mxu0 0.0
    %85 = vmatpush.msra.mxu0 0.0
    %86 = vmatpush.msra.mxu0 0.0
    %87 = vmatpush.msra.mxu0 0.0
    %88 = vmatpush.msra.mxu0 0.0
    %89 = vmatpush.msra.mxu0 0.0
    %90 = vmatpush.msra.mxu0 0.0
    %91 = vmatpush.msra.mxu0 0.0
    %92 = vmatpush.msra.mxu0 0.0
    %93 = vmatpush.msra.mxu0 0.0
    %94 = vmatpush.msra.mxu0 0.0
    %95 = vmatpush.msra.mxu0 0.0
    %96 = vmatpush.msra.mxu0 0.0
    %97 = vmatpush.msra.mxu0 %v82
    %98 = vmatpush.msra.mxu0 %v70
    %99 = vmatpush.msra.mxu0 %v69
    %100 = vmatmul.f32.gmra.mxu0 %v78
    %v101 = vpop.f32.mrf.mxu0
    %v102 = vadd.f32 %v74, %v101
    %103 = vdwg.mxu0
    %v104 = vmax.f32 %v102, 0.0
    %v105 = vld [vmem:[#allocation7] sm:$0xff]
    %v106 = vld [vmem:[#allocation7 + $0x8] sm:$0xff]
    %v107 = vld [vmem:[#allocation7 + $0x10] sm:$0xff]
    %v108 = vld [vmem:[#allocation7 + $0x18] sm:$0xff]
    %v109 = vld [vmem:[#allocation7 + $0x20] sm:$0xff]
    %v110 = vld [vmem:[#allocation7 + $0x28] sm:$0xff]
    %v111 = vld [vmem:[#allocation7 + $0x30] sm:$0xff]
    %v112 = vld [vmem:[#allocation7 + $0x38] sm:$0xff]
    %v113 = vld [vmem:[%s4] sm:$0x1]
    %v115 = vperm.slane %v113, 0
    %vm117 = vcmask 523264
    %v119 = vsel %vm117, %v104, 0
    %121 = vmatpush.msra.mxu0 0.0
    %122 = vmatpush.msra.mxu0 0.0
    %123 = vmatpush.msra.mxu0 0.0
    %124 = vmatpush.msra.mxu0 0.0
    %125 = vmatpush.msra.mxu0 0.0
    %126 = vmatpush.msra.mxu0 0.0
    %127 = vmatpush.msra.mxu0 0.0
    %128 = vmatpush.msra.mxu0 0.0
    %129 = vmatpush.msra.mxu0 %v112
    %130 = vmatpush.msra.mxu0 %v111
    %131 = vmatpush.msra.mxu0 %v110
    %132 = vmatpush.msra.mxu0 %v109
    %133 = vmatpush.msra.mxu0 %v108
    %134 = vmatpush.msra.mxu0 %v107
    %135 = vmatpush.msra.mxu0 %v106
    %136 = vmatpush.msra.mxu0 %v105
    %137 = vmatmul.f32.gmra.mxu0 %v119
    %v138 = vpop.f32.mrf.mxu0
    %v139 = vadd.f32 %v115, %v138
    %140 = vdwg.mxu0
    %v141 = vmax.f32 %v139, 0.0
    %142 = vst [vmem:[#allocation8] sm:$0xff] %v141
    // Predicated region
    $region34: #{tpu_custom_call.1} parent=1 // pred_check
      _
    $region35: #{tpu_custom_call.1} parent=1 // pred_check_branch
      %144 = sbr.rel (0) target = $region37
    $region36: #{tpu_custom_call.1} parent=1 // pred_region
      %146 = vsyncadd [#allocation4], 96
      %s147 = sshll.u32 [#allocation8], 4
      %s148 = int_to_ptr.vmem [resolvable:$true] %s147
      %s149 = sshll.u32 %s5, 4
      %s150 = int_to_ptr.hbm [resolvable:$true] %s149
      %155 = dma.vmem_to_hbm [thread:$0]  %s148, 32, %s150, [#allocation4], 32, 32, 2
    $region37: #{tpu_custom_call.1} parent=1 // pred_fallthru
      _
    // Predicated region
    $region38: #{tpu_custom_call.1} parent=1 // pred_check
      _
    $region39: #{tpu_custom_call.1} parent=1 // pred_check_branch
      %157 = sbr.rel (0) target = $region41
    $region40: #{tpu_custom_call.1} parent=1 // pred_region
      %159 = dma.done [#allocation4], 128
    $region41: #{tpu_custom_call.1} parent=1 // pred_fallthru
      _
    %160 = vsyncpa [#allocation3], 1
    %161 = vsyncpa [#allocation6], 1
    %162 = vsyncpa [#allocation4], 1

</llo_original>
